<compile_context>
chip_gen: v7x
topology: tpu7x:2x2x1
jax: 0.10.0
libtpu: 0.0.40
codegen_flags: <defaults>
</compile_context>

<pallas_src>
import functools

import jax
import jax.numpy as jnp
from jax.experimental import pallas as pl
from jax.experimental.pallas import tpu as pltpu

LANE = 128
SUBLANE = 8
TARGET_BLOCK_BYTES = 4 * 1024 * 1024   # per-input HBM->VMEM block
TARGET_CHUNK_BYTES = 512 * 1024        # in-kernel accumulate granularity


def _num_tensorcores_per_chip():
    """2 only on multi-TensorCore chips (v7x); 1 on v5e/v6e and unknowns."""
    try:
        kind = jax.devices()[0].device_kind.lower()
    except Exception:
        return 1
    return 2 if ("v7" in kind or "7x" in kind) else 1


def _vmem_capacity_bytes():
    try:
        return int(pltpu.get_tpu_info().vmem_capacity_bytes)
    except Exception:
        return None


def _rmse_partial_kernel(yhat_ref, y_ref, out_ref, *, tile_rows, chunk_rows,
                         valid_rows, nblocks, tiles_per_split, need_mask):
    """Accumulate sum((yhat - y)^2) of one (tile_rows, 128) block into a
    resident (8, 128) f32 partial-sum block (one per megacore split)."""
    s = pl.program_id(0)                 # megacore split
    i = pl.program_id(1)                 # reduction step within this split
    block_idx = s * tiles_per_split + i

    @pl.when(i == 0)
    def _():
        out_ref[...] = jnp.zeros_like(out_ref)

    nchunks = tile_rows // chunk_rows    # static

    def fold_chunk(c, masked):
        r0 = c * chunk_rows              # static Python offset
        d = (yhat_ref[pl.ds(r0, chunk_rows), :].astype(jnp.float32)
             - y_ref[pl.ds(r0, chunk_rows), :].astype(jnp.float32))
        sq = d * d
        if masked:
            row_ids = (block_idx * tile_rows + r0
                       + jax.lax.broadcasted_iota(jnp.int32,
                                                  (chunk_rows, LANE), 0))
            sq = jnp.where(row_ids < valid_rows, sq, 0.0)
        # Fold (chunk_rows, 128) -> (8, 128) with plain VPU adds; the single
        # expensive cross-lane reduce happens exactly once, outside the kernel.
        out_ref[...] += jnp.sum(
            sq.reshape(chunk_rows // SUBLANE, SUBLANE, LANE), axis=0)

    if need_mask:
        # Only the globally-last block is partial; every other block takes the
        # unmasked fast path (no per-tile iota / compare / select).
        is_last = block_idx == nblocks - 1

        @pl.when(jnp.logical_not(is_last))
        def _():
            for c in range(nchunks):
                fold_chunk(c, masked=False)

        @pl.when(is_last)
        def _():
            for c in range(nchunks):
                fold_chunk(c, masked=True)
    else:
        for c in range(nchunks):
            fold_chunk(c, masked=False)


def rmse_loss(yhat, y, *, num_splits=None):
    """RMSE = sqrt(mean((yhat - y)**2)) via a Pallas TPU reduction kernel."""
    assert yhat.shape == y.shape, "yhat and y must have the same shape"
    n = int(yhat.size)
    assert n > 0

    itemsize = jnp.dtype(yhat.dtype).itemsize
    align = SUBLANE * max(1, 4 // itemsize)   # 8 f32 / 16 bf16 / 32 int8 rows

    flat_yhat = yhat.reshape(-1)
    flat_y = y.reshape(-1)

    # The kernel consumes a lane-dense, sublane-aligned (rows_main, 128)
    # prefix; the tiny ragged tail (< (align+1)*128 elements) is summed in
    # plain JAX.  No full-array jnp.pad copy is ever made.
    rows_main = ((n // LANE) // align) * align
    n_main = rows_main * LANE

    if n_main < n:
        td = (flat_yhat[n_main:].astype(jnp.float32)
              - flat_y[n_main:].astype(jnp.float32))
        tail_ss = jnp.sum(td * td)
    else:
        tail_ss = jnp.float32(0.0)

    if rows_main == 0:                    # whole (tiny) input goes to the tail
        return jnp.sqrt(tail_ss * (1.0 / n))

    # TODO(synk): a manual-DMA 1-D path could avoid XLA materializing the
    # contiguous prefix slice in the (rare) n % 128 != 0 case.
    yh2d = flat_yhat[:n_main].reshape(rows_main, LANE)
    y2d = flat_y[:n_main].reshape(rows_main, LANE)

    # --- tile sizing: ~4 MiB per input block, scaled to the chip's VMEM ----
    vmem_cap = _vmem_capacity_bytes()
    if vmem_cap is not None:
        block_bytes = min(TARGET_BLOCK_BYTES, vmem_cap // 16)
        vmem_limit = min(vmem_cap // 2, 4 * block_bytes + (8 << 20))
    else:
        block_bytes = 2 << 20
        vmem_limit = None

    chunk_rows = min(TARGET_CHUNK_BYTES // (LANE * itemsize), rows_main)
    tile_rows = min(block_bytes // (LANE * itemsize), rows_main)
    tile_rows = max(chunk_rows, (tile_rows // chunk_rows) * chunk_rows)

    nblocks = -(-rows_main // tile_rows)
    need_mask = (rows_main % tile_rows) != 0   # only the last block is partial

    # Megacore split: only on multi-TC chips, and only when blocks divide
    # evenly so no duplicate / clamped block is ever DMA'd.
    if num_splits is None:
        num_splits = _num_tensorcores_per_chip()
    splits = num_splits if (num_splits > 1 and nblocks % num_splits == 0) else 1
    tiles_per_split = nblocks // splits

    def in_map(s, i):
        return (s * tiles_per_split + i, 0)

    kernel = functools.partial(
        _rmse_partial_kernel,
        tile_rows=tile_rows, chunk_rows=chunk_rows, valid_rows=rows_main,
        nblocks=nblocks, tiles_per_split=tiles_per_split, need_mask=need_mask)

    partials = pl.pallas_call(
        kernel,
        out_shape=jax.ShapeDtypeStruct((splits * SUBLANE, LANE), jnp.float32),
        grid_spec=pl.GridSpec(
            grid=(splits, tiles_per_split),
            in_specs=[
                pl.BlockSpec((tile_rows, LANE), in_map),
                pl.BlockSpec((tile_rows, LANE), in_map),
            ],
            out_specs=pl.BlockSpec((SUBLANE, LANE), lambda s, i: (s, 0)),
        ),
        compiler_params=pltpu.CompilerParams(
            dimension_semantics=("parallel", "arbitrary"),
            vmem_limit_bytes=vmem_limit,
        ),
        cost_estimate=pl.CostEstimate(
            flops=3 * n_main,
            transcendentals=0,
            bytes_accessed=2 * n_main * itemsize + splits * SUBLANE * LANE * 4,
        ),
    )(yh2d, y2d)

    # Final fold of the tiny partial slab + ragged tail; mean over the TRUE n.
    return jnp.sqrt((jnp.sum(partials) + tail_ss) * (1.0 / n))


if __name__ == "__main__":
    key = jax.random.PRNGKey(0)

    def check(shape):
        k = jax.random.fold_in(key, sum(shape))
        k1, k2 = jax.random.split(k)
        yhat = jax.random.normal(k1, shape, dtype=jnp.float32)
        y = jax.random.normal(k2, shape, dtype=jnp.float32)
        out = jax.block_until_ready(rmse_loss(yhat, y))
        ref = jnp.sqrt(jnp.mean((yhat - y) ** 2))
        assert jnp.allclose(out, ref, rtol=1e-5, atol=1e-6), (shape, out, ref)

    # Small shapes consistent with a generic regression loss: (B, C, H, W).
    check((2, 4, 16, 16))          # lane-aligned fast path, single block
    check((5, 300))                # ragged tail handled in JAX + kernel prefix
    check((1, 1, 1200, 150))       # multi-block grid + masked partial block

    print("KERNEL_OK")
</pallas_src>

<mosaic_0001>
module attributes {stable_mosaic.version = 11 : i64} {
  func.func @_rmse_partial_kernel(%arg0: i32, %arg1: i32, %arg2: memref<16x128xf32, #tpu.memory_space<vmem>>, %arg3: memref<16x128xf32, #tpu.memory_space<vmem>>, %arg4: memref<8x128xf32, #tpu.memory_space<vmem>>) attributes {dimension_semantics = [#tpu.dimension_semantics<parallel>, #tpu.dimension_semantics<arbitrary>], iteration_bounds = array<i64: 1, 1>, scalar_prefetch = 0 : i64, scratch_operands = 0 : i64, tpu.core_type = #tpu.core_type<tc>, window_params = [{transform_indices = @transform_0, window_bounds = array<i64: 16, 128>}, {transform_indices = @transform_1, window_bounds = array<i64: 16, 128>}, {transform_indices = @transform_2, window_bounds = array<i64: 8, 128>}]} {
    %c0_i32 = arith.constant 0 : i32
    %0 = arith.cmpi eq, %arg1, %c0_i32 : i32
    %1 = arith.extui %0 : i1 to i32
    %c0_i32_0 = arith.constant 0 : i32
    %2 = arith.cmpi ne, %1, %c0_i32_0 : i32
    scf.if %2 {
      %cst_8 = arith.constant 0.000000e+00 : f32
      %12 = vector.broadcast %cst_8 : f32 to vector<8x128xf32>
      %c0_9 = arith.constant 0 : index
      %c0_10 = arith.constant 0 : index
      %13 = vector.load %arg4[%c0_9, %c0_10] : memref<8x128xf32, #tpu.memory_space<vmem>>, vector<8x128xf32>
      tpu.vector_store %arg4[%c0_9, %c0_10], %12 {strides = array<i32>} : memref<8x128xf32, #tpu.memory_space<vmem>>, vector<8x128xf32>,
    } else {
    }
    %c0 = arith.constant 0 : index
    %c0_1 = arith.constant 0 : index
    %3 = vector.load %arg2[%c0, %c0_1] : memref<16x128xf32, #tpu.memory_space<vmem>>, vector<16x128xf32>
    %c0_2 = arith.constant 0 : index
    %c0_3 = arith.constant 0 : index
    %4 = vector.load %arg3[%c0_2, %c0_3] : memref<16x128xf32, #tpu.memory_space<vmem>>, vector<16x128xf32>
    %5 = arith.subf %3, %4 : vector<16x128xf32>
    %6 = arith.mulf %5, %5 : vector<16x128xf32>
    %c0_4 = arith.constant 0 : index
    %c0_5 = arith.constant 0 : index
    %7 = vector.load %arg4[%c0_4, %c0_5] : memref<8x128xf32, #tpu.memory_space<vmem>>, vector<8x128xf32>
    %8 = vector.shape_cast %6 : vector<16x128xf32> to vector<2x8x128xf32>
    %cst = arith.constant dense<0.000000e+00> : vector<8x128xf32>
    %9 = vector.multi_reduction <add>, %8, %cst [0] : vector<2x8x128xf32> to vector<8x128xf32>
    %10 = arith.addf %7, %9 : vector<8x128xf32>
    %c0_6 = arith.constant 0 : index
    %c0_7 = arith.constant 0 : index
    %11 = vector.load %arg4[%c0_6, %c0_7] : memref<8x128xf32, #tpu.memory_space<vmem>>, vector<8x128xf32>
    tpu.vector_store %arg4[%c0_6, %c0_7], %10 {strides = array<i32>} : memref<8x128xf32, #tpu.memory_space<vmem>>, vector<8x128xf32>,
    return
  }
  func.func @transform_0(%arg0: i32, %arg1: i32) -> (i32, i32) {
    %c1_i32 = arith.constant 1 : i32
    %0 = arith.muli %arg0, %c1_i32 : i32
    %1 = arith.addi %0, %arg1 : i32
    %c0_i32 = arith.constant 0 : i32
    %c0_i32_0 = arith.constant 0 : i32
    return %1, %c0_i32 : i32, i32
  }
  func.func @transform_1(%arg0: i32, %arg1: i32) -> (i32, i32) {
    %c1_i32 = arith.constant 1 : i32
    %0 = arith.muli %arg0, %c1_i32 : i32
    %1 = arith.addi %0, %arg1 : i32
    %c0_i32 = arith.constant 0 : i32
    %c0_i32_0 = arith.constant 0 : i32
    return %1, %c0_i32 : i32, i32
  }
  func.func @transform_2(%arg0: i32, %arg1: i32) -> (i32, i32) {
    %c0_i32 = arith.constant 0 : i32
    %c0_i32_0 = arith.constant 0 : i32
    return %arg0, %c0_i32 : i32, i32
  }
}

</mosaic_0001>

<llo_original>
// kernel: tpu_custom_call.1
$region0: #{tpu_custom_call.1}
  #allocation0 [shape = 'u32[]', space=smem, size = 0x4, offset = 0x4, fixed_abs, tag = 'smem constant byte address 0x4 - core index']
  #allocation1 [shape = 'u32[144,128]{1,0:T(1,128)}', space=vmem, size = 0x12000, scoped, tag = 'internal scratch']
  %s0 = inlined_call_operand.hbm [shape: f32[16,128], index: 0, kind: input, shape index: {}]
  %s1 = inlined_call_operand.hbm [shape: f32[16,128], index: 1, kind: input, shape index: {}]
  %s2 = inlined_call_operand.hbm [shape: f32[8,128], index: 2, kind: output, shape index: {}]
  %s3 = sld [smem:[#allocation0]]
  $region30: #{tpu_custom_call.1} parent=0
    _
  %s5 = ssub.s32 1, %s3
  %s6 = scalar_select 0, %s5, %s3
  $region1: #{tpu_custom_call.1} parent=0
    #allocation2 [shape = 'u8[8192]{0}', space=vmem, size = 0x2000, scoped, tag = 'input window, operand 0, single buffered']
    #allocation3 [shape = 's32[1]{0}', space=sflag, size = 0x4, scoped, tag = 'scoped memory for tpu_custom_call.1']
    #allocation4 [shape = 's32[1]{0}', space=sflag, size = 0x4, scoped, tag = 'scoped memory for tpu_custom_call.1']
    #allocation5 [shape = 'u8[8192]{0}', space=vmem, size = 0x2000, scoped, tag = 'input window, operand 1, single buffered']
    #allocation6 [shape = 's32[1]{0}', space=sflag, size = 0x4, scoped, tag = 'scoped memory for tpu_custom_call.1']
    #allocation7 [shape = 'u8[4096]{0}', space=vmem, size = 0x1000, scoped, tag = 'output window, operand 0, single buffered']
    %7 = vsyncpa [#allocation3], 0
    %8 = vsyncpa [#allocation6], 0
    %9 = vsyncpa [#allocation4], 0
    // Predicated region
    $region2: #{tpu_custom_call.1} parent=1 // pred_check
      _
    $region3: #{tpu_custom_call.1} parent=1 // pred_check_branch
      %11 = sbr.rel (0) target = $region5
    $region4: #{tpu_custom_call.1} parent=1 // pred_region
      %s12 = sadd.s32 0, 0
      %s13 = smul.u32 2, %s12
      %s15 = ssub.s32 256, 256
      %16 = vsyncadd [#allocation3], %s15
      %s17 = smul.addr %s13, 128
      %s18 = scalar_lea.hbm %s0, %s17
      %s19 = sshll.u32 [#allocation2], 4
      %s20 = int_to_ptr.vmem [resolvable:$true] %s19
      %25 = dma.hbm_to_vmem [thread:$0]  %s18, 256, %s20, [#allocation3], 128, 128, 8
    $region5: #{tpu_custom_call.1} parent=1 // pred_fallthru
      _
    // Predicated region
    $region6: #{tpu_custom_call.1} parent=1 // pred_check
      _
    $region7: #{tpu_custom_call.1} parent=1 // pred_check_branch
      %27 = sbr.rel (0) target = $region9
    $region8: #{tpu_custom_call.1} parent=1 // pred_region
      %s28 = sadd.s32 0, 0
      %s29 = smul.u32 2, %s28
      %s31 = ssub.s32 256, 256
      %32 = vsyncadd [#allocation6], %s31
      %s33 = smul.addr %s29, 128
      %s34 = scalar_lea.hbm %s1, %s33
      %s35 = sshll.u32 [#allocation5], 4
      %s36 = int_to_ptr.vmem [resolvable:$true] %s35
      %41 = dma.hbm_to_vmem [thread:$0]  %s34, 256, %s36, [#allocation6], 128, 128, 8
    $region9: #{tpu_custom_call.1} parent=1 // pred_fallthru
      _
    // Predicated region
    $region10: #{tpu_custom_call.1} parent=1 // pred_check
      _
    $region11: #{tpu_custom_call.1} parent=1 // pred_check_branch
      %43 = sbr.rel (0) target = $region13
    $region12: #{tpu_custom_call.1} parent=1 // pred_region
      %44 = dma.done [#allocation3], 256
    $region13: #{tpu_custom_call.1} parent=1 // pred_fallthru
      _
    // Predicated region
    $region14: #{tpu_custom_call.1} parent=1 // pred_check
      _
    $region15: #{tpu_custom_call.1} parent=1 // pred_check_branch
      %46 = sbr.rel (0) target = $region17
    $region16: #{tpu_custom_call.1} parent=1 // pred_region
      %47 = dma.done [#allocation6], 256
    $region17: #{tpu_custom_call.1} parent=1 // pred_fallthru
      _
    %s48 = sadd.s32 0, 0
    %s49 = smul.u32 2, %s48
    %s50 = sadd.s32 0, 0
    %s51 = smul.u32 2, %s50
    %p52 = scmp.eq.s32.totalorder 0, 0
    // Predicated region
    $region18: #{tpu_custom_call.1} parent=1 // pred_check
      %p53 = pneg %p52
    $region19: #{tpu_custom_call.1} parent=1 // pred_check_branch
      %55 = sbr.rel (%p53) target = $region21
    $region20: #{tpu_custom_call.1} parent=1 // pred_region
      %56 = vst [vmem:[#allocation7] sm:$0xff] 0.0
    $region21: #{tpu_custom_call.1} parent=1 // pred_fallthru
      _
    %v57 = vld [vmem:[#allocation2] sm:$0xff]
    %v58 = vld [vmem:[#allocation2 + $0x8] sm:$0xff]
    %v59 = vld [vmem:[#allocation5] sm:$0xff]
    %v60 = vld [vmem:[#allocation5 + $0x8] sm:$0xff]
    %v61 = vsub.f32 %v57, %v59
    %v62 = vsub.f32 %v58, %v60
    %v63 = vmul.f32 %v61, %v61
    %v64 = vmul.f32 %v62, %v62
    %v65 = vld [vmem:[#allocation7] sm:$0xff]
    %v66 = vadd.f32 %v63, %v64
    %v67 = vadd.f32 %v65, %v66
    %68 = vst [vmem:[#allocation7] sm:$0xff] %v67
    // Predicated region
    $region22: #{tpu_custom_call.1} parent=1 // pred_check
      _
    $region23: #{tpu_custom_call.1} parent=1 // pred_check_branch
      %70 = sbr.rel (0) target = $region25
    $region24: #{tpu_custom_call.1} parent=1 // pred_region
      %s72 = ssub.s32 128, 128
      %73 = vsyncadd [#allocation4], %s72
      %s75 = sshll.u32 [#allocation7], 4
      %s76 = int_to_ptr.vmem [resolvable:$true] %s75
      %78 = dma.vmem_to_hbm [thread:$0]  %s76, 128, %s2, [#allocation4]
    $region25: #{tpu_custom_call.1} parent=1 // pred_fallthru
      _
    // Predicated region
    $region26: #{tpu_custom_call.1} parent=1 // pred_check
      _
    $region27: #{tpu_custom_call.1} parent=1 // pred_check_branch
      %80 = sbr.rel (0) target = $region29
    $region28: #{tpu_custom_call.1} parent=1 // pred_region
      %81 = dma.done [#allocation4], 128
    $region29: #{tpu_custom_call.1} parent=1 // pred_fallthru
      _
    %82 = vsyncpa [#allocation3], 1
    %83 = vsyncpa [#allocation6], 1
    %84 = vsyncpa [#allocation4], 1

</llo_original>
